<compile_context>
chip_gen: v7x
topology: tpu7x:2x2x1
jax: 0.10.0
libtpu: 0.0.40
codegen_flags: <defaults>
</compile_context>

<pallas_src>
import functools
import math

import jax
import jax.numpy as jnp
from jax.experimental import pallas as pl
from jax.experimental.pallas import tpu as pltpu


def _mean_pool_kernel(x_ref, w_ref, b_ref, o_ref, acc_ref, *, inv_t):
    # x_ref  : (TB, C_in, T_BLK)  input tile, time on the lane axis
    # w_ref  : (C_in, Cp)         1x1-conv weight (lane-padded to Cp)
    # b_ref  : (1, Cp)            bias (padded channels hold -1e30)
    # o_ref  : (TB, Cp)           softmax output tile
    # acc_ref: (TB, C_in) f32     running sum over time
    t = pl.program_id(1)

    @pl.when(t == 0)
    def _init():
        acc_ref[...] = jnp.zeros_like(acc_ref)

    # Partial SUM over the time axis (VPU/XLU reduction; no MXU, no (T, C_out) temp).
    acc_ref[...] += jnp.sum(x_ref[...].astype(jnp.float32), axis=2)

    @pl.when(t == pl.num_programs(1) - 1)
    def _finalize():
        xm = acc_ref[...] * inv_t                              # (TB, C_in) mean over true T
        # 1x1 conv of the time-mean == one small MXU matmul.
        s = jnp.dot(xm, w_ref[...], preferred_element_type=jnp.float32) + b_ref[...]
        # Row-wise softmax over channels (padded channels: exp(-1e30) == 0).
        s = s - jnp.max(s, axis=1, keepdims=True)
        e = jnp.exp(s)
        denom = jnp.sum(e, axis=1, keepdims=True)
        o_ref[...] = (e * pl.reciprocal(denom, approx=True)).astype(o_ref.dtype)


_TB = 8                      # batch rows per grid step (sublane-dense output block)
_X_BLOCK_BUDGET = 4 << 20    # bytes per x input buffer (Pallas double-buffers it)


def _round_up(x, m):
    return (x + m - 1) // m * m


def mean_pooling_forward(x_nchw, weight_oihw, bias):
    """x_nchw: (N, C_in, T, 1); weight_oihw: (C_out, C_in, 1, 1); bias: (C_out,)."""
    N, C_in, T, Wdim = x_nchw.shape
    assert Wdim == 1
    C_out = weight_oihw.shape[0]
    dtype = x_nchw.dtype
    itemsize = jnp.dtype(dtype).itemsize

    # ---- layout prep: only the free W=1 squeeze, NO transpose of x ----
    x = x_nchw[:, :, :, 0]                                     # (N, C_in, T)

    # Pad N up to a multiple of the batch tile (padded rows sliced off at the end).
    n_pad = _round_up(max(N, 1), _TB)
    if n_pad != N:
        x = jnp.pad(x, ((0, n_pad - N), (0, 0), (0, 0)))

    # Pick the time tile so one x buffer fits the VMEM budget; zero-pad T if tiled
    # (zeros are harmless: the kernel accumulates a SUM and divides by the true T).
    if _TB * C_in * T * itemsize <= _X_BLOCK_BUDGET:
        t_blk, t_pad = T, T
    else:
        t_blk = max(128, (_X_BLOCK_BUDGET // (_TB * C_in * itemsize)) // 128 * 128)
        t_pad = _round_up(T, t_blk)
        if t_pad != T:
            x = jnp.pad(x, ((0, 0), (0, 0), (0, t_pad - T)))

    # Pad C_out to a lane-dense multiple of 128 (one-time weight prep); padded
    # channels get bias = -1e30 so they contribute exactly 0 to the softmax.
    c_pad = _round_up(C_out, 128)
    w = jnp.transpose(weight_oihw[:, :, 0, 0], (1, 0)).astype(jnp.float32)   # (C_in, C_out)
    b = bias.astype(jnp.float32)
    if c_pad != C_out:
        w = jnp.pad(w, ((0, 0), (0, c_pad - C_out)))
        b = jnp.pad(b, (0, c_pad - C_out), constant_values=-1e30)
    b = b.reshape(1, c_pad)

    grid = (n_pad // _TB, t_pad // t_blk)

    cost = pl.CostEstimate(
        flops=int(2 * n_pad * C_in * c_pad + n_pad * C_in * t_pad),
        transcendentals=int(n_pad * c_pad),
        bytes_accessed=int(n_pad * t_pad * C_in * itemsize
                           + C_in * c_pad * 4 + n_pad * c_pad * itemsize),
    )

    out_full = pl.pallas_call(
        functools.partial(_mean_pool_kernel, inv_t=1.0 / T),
        out_shape=jax.ShapeDtypeStruct((n_pad, c_pad), dtype),
        grid_spec=pltpu.PrefetchScalarGridSpec(
            num_scalar_prefetch=0,
            grid=grid,
            in_specs=[
                pl.BlockSpec((_TB, C_in, t_blk), lambda n, t: (n, 0, t)),
                pl.BlockSpec((C_in, c_pad), lambda n, t: (0, 0)),
                pl.BlockSpec((1, c_pad), lambda n, t: (0, 0)),
            ],
            out_specs=pl.BlockSpec((_TB, c_pad), lambda n, t: (n, 0)),
            scratch_shapes=[pltpu.VMEM((_TB, C_in), jnp.float32)],
        ),
        compiler_params=pltpu.CompilerParams(
            dimension_semantics=("parallel", "arbitrary"),
        ),
        cost_estimate=cost,
    )(x, w, b)

    # Strip batch / channel padding (tiny compared to streaming x).
    return out_full[:N, :C_out], []


def init_params(key, n_in, n_out):
    """Replicates MeanPooling.init_layer deterministically."""
    n = n_in * 1 * 1
    std = math.sqrt(2.0 / n)
    scale = std * math.sqrt(3.0)
    weight = jax.random.uniform(
        key, (n_out, n_in, 1, 1), dtype=jnp.float32, minval=-scale, maxval=scale
    )
    bias = jnp.zeros((n_out,), dtype=jnp.float32)
    return weight, bias


if __name__ == "__main__":
    key = jax.random.PRNGKey(0)
    k_x, k_w = jax.random.split(key)

    # (samples_num, freq_bins, time_steps, 1) == NCHW with W=1
    N, C_in, T = 2, 4, 16
    C_out = 8
    x = jax.random.normal(k_x, (N, C_in, T, 1), dtype=jnp.float32)
    weight, bias = init_params(k_w, C_in, C_out)

    out, extras = mean_pooling_forward(x, weight, bias)
    out = jax.block_until_ready(out)

    # Reference check in plain JAX (same math, outside Pallas)
    ref = jnp.einsum("nct,oc->not", x[:, :, :, 0], weight[:, :, 0, 0]) + bias[None, :, None]
    ref = jnp.mean(ref, axis=2)
    ref = jax.nn.softmax(ref, axis=1)

    assert out.shape == (N, C_out)
    assert extras == []
    assert bool(jnp.all(jnp.isfinite(out)))
    # pl.reciprocal(approx=True) in the softmax denominator -> ~1e-3 relative error.
    assert jnp.allclose(out, ref, atol=2e-3, rtol=2e-3)

    print("KERNEL_OK")
</pallas_src>

<mosaic_0001>
module attributes {stable_mosaic.version = 11 : i64} {
  func.func @_mean_pool_kernel(%arg0: i32, %arg1: i32, %arg2: memref<8x4x16xf32, #tpu.memory_space<vmem>>, %arg3: memref<4x128xf32, #tpu.memory_space<vmem>>, %arg4: memref<1x128xf32, #tpu.memory_space<vmem>>, %arg5: memref<8x128xf32, #tpu.memory_space<vmem>>, %arg6: memref<8x4xf32, #tpu.memory_space<vmem>>) attributes {dimension_semantics = [#tpu.dimension_semantics<parallel>, #tpu.dimension_semantics<arbitrary>], iteration_bounds = array<i64: 1, 1>, scalar_prefetch = 0 : i64, scratch_operands = 1 : i64, tpu.core_type = #tpu.core_type<tc>, window_params = [{transform_indices = @transform_0, window_bounds = array<i64: 8, 4, 16>}, {pipeline_mode = #tpu.pipeline_mode<synchronous>, transform_indices = @transform_1, window_bounds = array<i64: 4, 128>}, {pipeline_mode = #tpu.pipeline_mode<synchronous>, transform_indices = @transform_2, window_bounds = array<i64: 1, 128>}, {transform_indices = @transform_3, window_bounds = array<i64: 8, 128>}]} {
    %c0_i32 = arith.constant 0 : i32
    %0 = arith.cmpi eq, %arg1, %c0_i32 : i32
    %1 = arith.extui %0 : i1 to i32
    %c0_i32_0 = arith.constant 0 : i32
    %2 = arith.cmpi ne, %1, %c0_i32_0 : i32
    scf.if %2 {
      %cst_9 = arith.constant 0.000000e+00 : f32
      %11 = vector.broadcast %cst_9 : f32 to vector<8x4xf32>
      %c0_10 = arith.constant 0 : index
      %c0_11 = arith.constant 0 : index
      %12 = vector.load %arg6[%c0_10, %c0_11] : memref<8x4xf32, #tpu.memory_space<vmem>>, vector<8x4xf32>
      tpu.vector_store %arg6[%c0_10, %c0_11], %11 {strides = array<i32>} : memref<8x4xf32, #tpu.memory_space<vmem>>, vector<8x4xf32>,
    } else {
    }
    %c0 = arith.constant 0 : index
    %c0_1 = arith.constant 0 : index
    %3 = vector.load %arg6[%c0, %c0_1] : memref<8x4xf32, #tpu.memory_space<vmem>>, vector<8x4xf32>
    %c0_2 = arith.constant 0 : index
    %c0_3 = arith.constant 0 : index
    %c0_4 = arith.constant 0 : index
    %4 = vector.load %arg2[%c0_2, %c0_3, %c0_4] : memref<8x4x16xf32, #tpu.memory_space<vmem>>, vector<8x4x16xf32>
    %cst = arith.constant dense<0.000000e+00> : vector<8x4xf32>
    %5 = vector.multi_reduction <add>, %4, %cst [2] : vector<8x4x16xf32> to vector<8x4xf32>
    %6 = arith.addf %3, %5 : vector<8x4xf32>
    %c0_5 = arith.constant 0 : index
    %c0_6 = arith.constant 0 : index
    %7 = vector.load %arg6[%c0_5, %c0_6] : memref<8x4xf32, #tpu.memory_space<vmem>>, vector<8x4xf32>
    tpu.vector_store %arg6[%c0_5, %c0_6], %6 {strides = array<i32>} : memref<8x4xf32, #tpu.memory_space<vmem>>, vector<8x4xf32>,
    %c0_i32_7 = arith.constant 0 : i32
    %8 = arith.cmpi eq, %arg1, %c0_i32_7 : i32
    %9 = arith.extui %8 : i1 to i32
    %c0_i32_8 = arith.constant 0 : i32
    %10 = arith.cmpi ne, %9, %c0_i32_8 : i32
    scf.if %10 {
      %c0_9 = arith.constant 0 : index
      %c0_10 = arith.constant 0 : index
      %11 = vector.load %arg6[%c0_9, %c0_10] : memref<8x4xf32, #tpu.memory_space<vmem>>, vector<8x4xf32>
      %cst_11 = arith.constant 6.250000e-02 : f32
      %12 = vector.broadcast %cst_11 : f32 to vector<8x4xf32>
      %13 = arith.mulf %11, %12 : vector<8x4xf32>
      %c0_12 = arith.constant 0 : index
      %c0_13 = arith.constant 0 : index
      %14 = vector.load %arg3[%c0_12, %c0_13] : memref<4x128xf32, #tpu.memory_space<vmem>>, vector<4x128xf32>
      %cst_14 = arith.constant dense<0.000000e+00> : vector<8x128xf32>
      %15 = tpu.matmul %13, %14, %cst_14 {dimension_numbers = #tpu.dot_dimension_numbers<[1], [0], [0], [1], [0, 0, 1, 1], [], []>} : vector<8x4xf32>, vector<4x128xf32>, vector<8x128xf32> -> vector<8x128xf32>
      %c0_15 = arith.constant 0 : index
      %c0_16 = arith.constant 0 : index
      %16 = vector.load %arg4[%c0_15, %c0_16] : memref<1x128xf32, #tpu.memory_space<vmem>>, vector<1x128xf32>
      %17 = vector.broadcast %16 : vector<1x128xf32> to vector<8x128xf32>
      %18 = arith.addf %15, %17 : vector<8x128xf32>
      %cst_17 = arith.constant dense<0xFF800000> : vector<8xf32>
      %19 = vector.multi_reduction <maximumf>, %18, %cst_17 [1] : vector<8x128xf32> to vector<8xf32>
      %20 = vector.shape_cast %19 : vector<8xf32> to vector<8x1xf32>
      %21 = vector.broadcast %20 : vector<8x1xf32> to vector<8x128xf32>
      %22 = arith.subf %18, %21 : vector<8x128xf32>
      %23 = math.exp %22 : vector<8x128xf32>
      %cst_18 = arith.constant dense<0.000000e+00> : vector<8xf32>
      %24 = vector.multi_reduction <add>, %23, %cst_18 [1] : vector<8x128xf32> to vector<8xf32>
      %25 = vector.shape_cast %24 : vector<8xf32> to vector<8x1xf32>
      %26 = tpu.reciprocal %25 {approx = true} : vector<8x1xf32> -> vector<8x1xf32>
      %27 = vector.broadcast %26 : vector<8x1xf32> to vector<8x128xf32>
      %28 = arith.mulf %23, %27 : vector<8x128xf32>
      %c0_19 = arith.constant 0 : index
      %c0_20 = arith.constant 0 : index
      %29 = vector.load %arg5[%c0_19, %c0_20] : memref<8x128xf32, #tpu.memory_space<vmem>>, vector<8x128xf32>
      tpu.vector_store %arg5[%c0_19, %c0_20], %28 {strides = array<i32>} : memref<8x128xf32, #tpu.memory_space<vmem>>, vector<8x128xf32>,
    } else {
    }
    return
  }
  func.func @transform_0(%arg0: i32, %arg1: i32) -> (i32, i32, i32) {
    %c0_i32 = arith.constant 0 : i32
    %c0_i32_0 = arith.constant 0 : i32
    return %arg0, %c0_i32, %arg1 : i32, i32, i32
  }
  func.func @transform_1(%arg0: i32, %arg1: i32) -> (i32, i32) {
    %c0_i32 = arith.constant 0 : i32
    %c0_i32_0 = arith.constant 0 : i32
    %c0_i32_1 = arith.constant 0 : i32
    return %c0_i32, %c0_i32_0 : i32, i32
  }
  func.func @transform_2(%arg0: i32, %arg1: i32) -> (i32, i32) {
    %c0_i32 = arith.constant 0 : i32
    %c0_i32_0 = arith.constant 0 : i32
    %c0_i32_1 = arith.constant 0 : i32
    return %c0_i32, %c0_i32_0 : i32, i32
  }
  func.func @transform_3(%arg0: i32, %arg1: i32) -> (i32, i32) {
    %c0_i32 = arith.constant 0 : i32
    %c0_i32_0 = arith.constant 0 : i32
    return %arg0, %c0_i32 : i32, i32
  }
}

</mosaic_0001>

<llo_original>
// kernel: tpu_custom_call.1
$region0: #{tpu_custom_call.1}
  #allocation0 [shape = 'u32[]', space=smem, size = 0x4, offset = 0x4, fixed_abs, tag = 'smem constant byte address 0x4 - core index']
  #allocation1 [shape = 'u32[144,128]{1,0:T(1,128)}', space=vmem, size = 0x12000, scoped, tag = 'internal scratch']
  #allocation2 [shape = 'f32[8,4]{1,0:T(8,128)}', space=vmem, size = 0x1000, scoped, tag = 'scratch operand']
  %s0 = inlined_call_operand.hbm [shape: f32[8,4,16], index: 0, kind: input, shape index: {}]
  %s1 = inlined_call_operand.hbm [shape: f32[4,128], index: 1, kind: input, shape index: {}]
  %s2 = inlined_call_operand.vmem [shape: f32[1,128], index: 2, kind: input, shape index: {}]
  %s3 = inlined_call_operand.hbm [shape: f32[8,128], index: 3, kind: output, shape index: {}]
  %s4 = sld [smem:[#allocation0]]
  $region38: #{tpu_custom_call.1} parent=0
    _
  %s6 = ssub.s32 1, %s4
  %s7 = scalar_select 0, %s6, %s4
  $region1: #{tpu_custom_call.1} parent=0
    #allocation3 [shape = 'u8[16384]{0}', space=vmem, size = 0x4000, scoped, tag = 'input window, operand 0, single buffered']
    #allocation4 [shape = 's32[1]{0}', space=sflag, size = 0x4, scoped, tag = 'scoped memory for tpu_custom_call.1']
    #allocation5 [shape = 's32[1]{0}', space=sflag, size = 0x4, scoped, tag = 'scoped memory for tpu_custom_call.1']
    #allocation6 [shape = 'u8[2048]{0}', space=vmem, size = 0x800, scoped, tag = 'input window, operand 1, single buffered']
    #allocation7 [shape = 's32[1]{0}', space=sflag, size = 0x4, scoped, tag = 'scoped memory for tpu_custom_call.1']
    #allocation8 [shape = 'u8[4096]{0}', space=vmem, size = 0x1000, scoped, tag = 'output window, operand 0, single buffered']
    %8 = vsyncpa [#allocation4], 0
    %9 = vsyncpa [#allocation7], 0
    %10 = vsyncpa [#allocation5], 0
    // Predicated region
    $region2: #{tpu_custom_call.1} parent=1 // pred_check
      _
    $region3: #{tpu_custom_call.1} parent=1 // pred_check_branch
      %12 = sbr.rel (0) target = $region5
    $region4: #{tpu_custom_call.1} parent=1 // pred_region
      %s14 = ssub.s32 512, 512
      %15 = vsyncadd [#allocation4], %s14
      %s16 = sshll.u32 [#allocation3], 4
      %s17 = int_to_ptr.vmem [resolvable:$true] %s16
      %22 = dma.hbm_to_vmem [thread:$0]  %s0, 512, %s17, [#allocation4], 64, 64, 4
    $region5: #{tpu_custom_call.1} parent=1 // pred_fallthru
      _
    // Predicated region
    $region6: #{tpu_custom_call.1} parent=1 // pred_check
      _
    $region7: #{tpu_custom_call.1} parent=1 // pred_check_branch
      %24 = sbr.rel (0) target = $region9
    $region8: #{tpu_custom_call.1} parent=1 // pred_region
      %s26 = ssub.s32 64, 64
      %27 = vsyncadd [#allocation7], %s26
      %s29 = sshll.u32 [#allocation6], 4
      %s30 = int_to_ptr.vmem [resolvable:$true] %s29
      %32 = dma.hbm_to_vmem [thread:$0]  %s1, 64, %s30, [#allocation7]
    $region9: #{tpu_custom_call.1} parent=1 // pred_fallthru
      _
    // Predicated region
    $region10: #{tpu_custom_call.1} parent=1 // pred_check
      _
    $region11: #{tpu_custom_call.1} parent=1 // pred_check_branch
      %34 = sbr.rel (0) target = $region13
    $region12: #{tpu_custom_call.1} parent=1 // pred_region
      _
    $region13: #{tpu_custom_call.1} parent=1 // pred_fallthru
      _
    // Predicated region
    $region14: #{tpu_custom_call.1} parent=1 // pred_check
      _
    $region15: #{tpu_custom_call.1} parent=1 // pred_check_branch
      %36 = sbr.rel (0) target = $region17
    $region16: #{tpu_custom_call.1} parent=1 // pred_region
      %37 = dma.done [#allocation4], 512
    $region17: #{tpu_custom_call.1} parent=1 // pred_fallthru
      _
    // Predicated region
    $region18: #{tpu_custom_call.1} parent=1 // pred_check
      _
    $region19: #{tpu_custom_call.1} parent=1 // pred_check_branch
      %39 = sbr.rel (0) target = $region21
    $region20: #{tpu_custom_call.1} parent=1 // pred_region
      %40 = dma.done [#allocation7], 64
    $region21: #{tpu_custom_call.1} parent=1 // pred_fallthru
      _
    %p41 = scmp.eq.s32.totalorder 0, 0
    // Predicated region
    $region22: #{tpu_custom_call.1} parent=1 // pred_check
      %p42 = pneg %p41
    $region23: #{tpu_custom_call.1} parent=1 // pred_check_branch
      %44 = sbr.rel (%p42) target = $region25
    $region24: #{tpu_custom_call.1} parent=1 // pred_region
      %vm45 = vcmask 31744
      %46 = vst.msk [vmem:[#allocation2] sm:$0xff] %vm45, 0.0
    $region25: #{tpu_custom_call.1} parent=1 // pred_fallthru
      _
    %v47 = vld [vmem:[#allocation2] sm:$0xff]
    %v48 = vld [vmem:[#allocation3] sm:$0xf]
    %v49 = vld [vmem:[#allocation3 + $0x4] sm:$0xf]
    %v50 = vld [vmem:[#allocation3 + $0x8] sm:$0xf]
    %v51 = vld [vmem:[#allocation3 + $0xc] sm:$0xf]
    %v52 = vld [vmem:[#allocation3 + $0x10] sm:$0xf]
    %v53 = vld [vmem:[#allocation3 + $0x14] sm:$0xf]
    %v54 = vld [vmem:[#allocation3 + $0x18] sm:$0xf]
    %v55 = vld [vmem:[#allocation3 + $0x1c] sm:$0xf]
    %vm56 = vcmask 125952
    %v57 = vsel %vm56, %v48, 0.0
    %58 = vadd.xlane.f32.xlu0 %v57
    %v59 = vpop.xlane.xlu0 %58
    %v60 = vsel %vm56, %v49, 0.0
    %61 = vadd.xlane.f32.xlu0 %v60
    %v62 = vpop.xlane.xlu0 %61
    %v63 = vsel %vm56, %v50, 0.0
    %64 = vadd.xlane.f32.xlu0 %v63
    %v65 = vpop.xlane.xlu0 %64
    %v66 = vsel %vm56, %v51, 0.0
    %67 = vadd.xlane.f32.xlu0 %v66
    %v68 = vpop.xlane.xlu0 %67
    %v69 = vsel %vm56, %v52, 0.0
    %70 = vadd.xlane.f32.xlu0 %v69
    %v71 = vpop.xlane.xlu0 %70
    %v72 = vsel %vm56, %v53, 0.0
    %73 = vadd.xlane.f32.xlu0 %v72
    %v74 = vpop.xlane.xlu0 %73
    %v75 = vsel %vm56, %v54, 0.0
    %76 = vadd.xlane.f32.xlu0 %v75
    %v77 = vpop.xlane.xlu0 %76
    %v78 = vsel %vm56, %v55, 0.0
    %79 = vadd.xlane.f32.xlu0 %v78
    %v80 = vpop.xlane.xlu0 %79
    %v89 = vlaneseq
    %v90 = vand.u32 %v89, 127
    %v91 = vlaneseq
    %v92 = vshrl.u32 %v91, 7
    %v93 = vsub.s32 %v90, %v92
    %v94 = vrot.slane %v59, %v93
    %v95 = vlaneseq
    %v96 = vshrl.u32 %v95, 7
    %v97 = vsub.s32 %v90, %v96
    %v98 = vrot.slane %v62, %v97
    %v99 = vlaneseq
    %v100 = vshrl.u32 %v99, 7
    %v101 = vsub.s32 %v90, %v100
    %v102 = vrot.slane %v65, %v101
    %v103 = vlaneseq
    %v104 = vshrl.u32 %v103, 7
    %v105 = vsub.s32 %v90, %v104
    %v106 = vrot.slane %v68, %v105
    %v107 = vlaneseq
    %v108 = vshrl.u32 %v107, 7
    %v109 = vsub.s32 %v90, %v108
    %v110 = vrot.slane %v71, %v109
    %v111 = vlaneseq
    %v112 = vshrl.u32 %v111, 7
    %v113 = vsub.s32 %v90, %v112
    %v114 = vrot.slane %v74, %v113
    %v115 = vlaneseq
    %v116 = vshrl.u32 %v115, 7
    %v117 = vsub.s32 %v90, %v116
    %v118 = vrot.slane %v77, %v117
    %v119 = vlaneseq
    %v120 = vshrl.u32 %v119, 7
    %v121 = vsub.s32 %v90, %v120
    %v122 = vrot.slane %v80, %v121
    %vm123 = vcmask 1041409
    %v124 = vsel %vm123, %v98, %v94
    %vm125 = vcmask 1042434
    %v126 = vsel %vm125, %v102, %v124
    %vm127 = vcmask 1043459
    %v128 = vsel %vm127, %v106, %v126
    %vm129 = vcmask 1044484
    %v130 = vsel %vm129, %v110, %v128
    %vm131 = vcmask 1045509
    %v132 = vsel %vm131, %v114, %v130
    %vm133 = vcmask 1046534
    %v134 = vsel %vm133, %v118, %v132
    %vm135 = vcmask 1047559
    %v136 = vsel %vm135, %v122, %v134
    %v138 = vadd.f32 %v47, %v136
    %vm139 = vcmask 31744
    %140 = vst.msk [vmem:[#allocation2] sm:$0xff] %vm139, %v138
    // Predicated region
    $region26: #{tpu_custom_call.1} parent=1 // pred_check
      %p141 = pneg %p41
    $region27: #{tpu_custom_call.1} parent=1 // pred_check_branch
      %143 = sbr.rel (%p141) target = $region29
    $region28: #{tpu_custom_call.1} parent=1 // pred_region
      %v144 = vld [vmem:[#allocation2] sm:$0xff]
      %v145 = vmul.f32 %v144, 0.0625
      %v146 = vld [vmem:[#allocation6] sm:$0xf]
      %v147 = vld [vmem:[%s2] sm:$0x1]
      %v149 = vlaneseq
      %v150 = vshrl.u32 %v149, 7
      %v151 = vsub.s32 0, %v150
      %v152 = vrot.slane %v147, %v151
      %v155 = vsel %vm139, %v145, 0
      %vm157 = vcmask 1043456
      %v159 = vsel %vm157, %v146, 0
      %161 = vmatprep.subr.mxu0 0.0
      %162 = vmatpush1.msra.mxu0 %v159
      %163 = vmatprep.subr.mxu0 0.0
      %164 = vmatpush1.msra.mxu0 0.0
      %165 = vmatprep.subr.mxu0 0.0
      %166 = vmatpush1.msra.mxu0 0.0
      %167 = vmatprep.subr.mxu0 0.0
      %168 = vmatpush1.msra.mxu0 0.0
      %169 = vmatprep.subr.mxu0 0.0
      %170 = vmatpush1.msra.mxu0 0.0
      %171 = vmatprep.subr.mxu0 0.0
      %172 = vmatpush1.msra.mxu0 0.0
      %173 = vmatprep.subr.mxu0 0.0
      %174 = vmatpush1.msra.mxu0 0.0
      %175 = vmatprep.subr.mxu0 0.0
      %176 = vmatpush1.msra.mxu0 0.0
      %177 = vmatprep.subr.mxu0 0.0
      %178 = vmatpush1.msra.mxu0 0.0
      %179 = vmatprep.subr.mxu0 0.0
      %180 = vmatpush1.msra.mxu0 0.0
      %181 = vmatprep.subr.mxu0 0.0
      %182 = vmatpush1.msra.mxu0 0.0
      %183 = vmatprep.subr.mxu0 0.0
      %184 = vmatpush1.msra.mxu0 0.0
      %185 = vmatprep.subr.mxu0 0.0
      %186 = vmatpush1.msra.mxu0 0.0
      %187 = vmatprep.subr.mxu0 0.0
      %188 = vmatpush1.msra.mxu0 0.0
      %189 = vmatprep.subr.mxu0 0.0
      %190 = vmatpush1.msra.mxu0 0.0
      %191 = vmatprep.subr.mxu0 0.0
      %192 = vmatpush1.msra.mxu0 0.0
      %193 = vmatprep.subr.mxu0 0.0
      %194 = vmatpush1.msra.mxu0 0.0
      %195 = vmatprep.subr.mxu0 0.0
      %196 = vmatpush1.msra.mxu0 0.0
      %197 = vmatprep.subr.mxu0 0.0
      %198 = vmatpush1.msra.mxu0 0.0
      %199 = vmatprep.subr.mxu0 0.0
      %200 = vmatpush1.msra.mxu0 0.0
      %201 = vmatprep.subr.mxu0 0.0
      %202 = vmatpush1.msra.mxu0 0.0
      %203 = vmatprep.subr.mxu0 0.0
      %204 = vmatpush1.msra.mxu0 0.0
      %205 = vmatprep.subr.mxu0 0.0
      %206 = vmatpush1.msra.mxu0 0.0
      %207 = vmatprep.subr.mxu0 0.0
      %208 = vmatpush1.msra.mxu0 0.0
      %209 = vmatprep.subr.mxu0 0.0
      %210 = vmatpush1.msra.mxu0 0.0
      %211 = vmatprep.subr.mxu0 0.0
      %212 = vmatpush1.msra.mxu0 0.0
      %213 = vmatprep.subr.mxu0 0.0
      %214 = vmatpush1.msra.mxu0 0.0
      %215 = vmatprep.subr.mxu0 0.0
      %216 = vmatpush1.msra.mxu0 0.0
      %217 = vmatprep.subr.mxu0 0.0
      %218 = vmatpush1.msra.mxu0 0.0
      %219 = vmatprep.subr.mxu0 0.0
      %220 = vmatpush1.msra.mxu0 0.0
      %221 = vmatprep.subr.mxu0 0.0
      %222 = vmatpush1.msra.mxu0 0.0
      %223 = vmatprep.subr.mxu0 0.0
      %224 = vmatpush1.msra.mxu0 0.0
      %225 = vmatprep.mubr.f32.mxu0 0.0
      %226 = vmatmul.mubr.f32.gmra.mrb[0].mxu0 %v155
      %v227 = vpop.f32.mrb[0].mxu0
      %v228 = vadd.f32 %v152, %v227
      %v229 = vpop.f32.mrb[0].mxu0
      %230 = vdwg.mxu0
      %231 = vmax.xlane.f32.xlu0 %v228
      %v232 = vpop.xlane.xlu0 %231
      %v233 = vsub.f32 %v228, %v232
      %v234 = vmul.f32 %v233, 1.442695
      %v235 = vpow.pop %v234
      %236 = vadd.xlane.f32.xlu0 %v235
      %v237 = vpop.xlane.xlu0 %236
      %v238 = vrcp.pop %v237
      %v239 = vmul.f32 %v235, %v238
      %240 = vst [vmem:[#allocation8] sm:$0xff] %v239
    $region29: #{tpu_custom_call.1} parent=1 // pred_fallthru
      _
    // Predicated region
    $region30: #{tpu_custom_call.1} parent=1 // pred_check
      _
    $region31: #{tpu_custom_call.1} parent=1 // pred_check_branch
      %242 = sbr.rel (0) target = $region33
    $region32: #{tpu_custom_call.1} parent=1 // pred_region
      %s244 = ssub.s32 128, 128
      %245 = vsyncadd [#allocation5], %s244
      %s247 = sshll.u32 [#allocation8], 4
      %s248 = int_to_ptr.vmem [resolvable:$true] %s247
      %250 = dma.vmem_to_hbm [thread:$0]  %s248, 128, %s3, [#allocation5]
    $region33: #{tpu_custom_call.1} parent=1 // pred_fallthru
      _
    // Predicated region
    $region34: #{tpu_custom_call.1} parent=1 // pred_check
      _
    $region35: #{tpu_custom_call.1} parent=1 // pred_check_branch
      %252 = sbr.rel (0) target = $region37
    $region36: #{tpu_custom_call.1} parent=1 // pred_region
      %253 = dma.done [#allocation5], 128
    $region37: #{tpu_custom_call.1} parent=1 // pred_fallthru
      _
    %254 = vsyncpa [#allocation4], 1
    %255 = vsyncpa [#allocation7], 1
    %256 = vsyncpa [#allocation5], 1

</llo_original>
